<compile_context>
chip_gen: v7x
topology: tpu7x:2x2x1
jax: 0.10.0
libtpu: 0.0.40
codegen_flags: <defaults>
</compile_context>

<pallas_src>
import jax
import jax.numpy as jnp
from jax.experimental import pallas as pl
from jax.experimental.pallas import tpu as pltpu

D_IN, D_H1, D_H2, D_OUT = 80, 30, 10, 4

# Per-row VMEM cost of the double-buffered streamed blocks (f32):
#   x   block (tb, 80)                  -> 320 B/row, x2 buffers
#   out block (tb, 4), lane-padded 128  -> 512 B/row, x2 buffers
_STREAM_BYTES_PER_ROW = 2 * (D_IN * 4) + 2 * (128 * 4)   # 1664 B/row
_BLOCK_VMEM_BUDGET = 28 * 1024 * 1024                     # streamed-block budget
_VMEM_LIMIT_BYTES = 36 * 1024 * 1024                      # < v7x's 64 MiB physical


def _round_up(v, m):
    return ((v + m - 1) // m) * m


def mlp_kernel(x_ref, w1_ref, b1_ref, w2_ref, b2_ref, w3_ref, b3_ref, o_ref):
    x = x_ref[...]

    # hidden1: 80 -> 30, ReLU
    h1 = jnp.dot(x, w1_ref[...], preferred_element_type=jnp.float32) + b1_ref[...]
    h1 = jnp.maximum(h1, 0.0)

    # hidden2: 30 -> 10, ReLU
    h2 = jnp.dot(h1, w2_ref[...], preferred_element_type=jnp.float32) + b2_ref[...]
    h2 = jnp.maximum(h2, 0.0)

    # output: 10 -> 4 (no activation)
    out = jnp.dot(h2, w3_ref[...], preferred_element_type=jnp.float32) + b3_ref[...]
    o_ref[...] = out.astype(o_ref.dtype)


def _pick_batch_tile(B, block_b):
    """Largest batch tile that fits the VMEM budget; >=2 tiles for big batches."""
    cap = _BLOCK_VMEM_BUDGET // _STREAM_BYTES_PER_ROW     # ~17.6K rows
    tb = min(block_b, cap)
    if B <= tb:
        if B >= 1024:
            # Whole batch would fit in one tile: split into two so the
            # "parallel" grid axis can occupy both TensorCores (v7x) and the
            # input DMA has a second step to overlap with.
            tb = _round_up((B + 1) // 2, 256)
        else:
            tb = _round_up(B, 8)
    return max(8, _round_up(tb, 8))


def multiclass_forward(x, params, *, block_b=16384):
    """Forward pass. x: [B, 80] float32 -> [B, 4] float32."""
    B = x.shape[0]
    w1, b1 = params["w1"], params["b1"]   # (80, 30), (1, 30)
    w2, b2 = params["w2"], params["b2"]   # (30, 10), (1, 10)
    w3, b3 = params["w3"], params["b3"]   # (10, 4),  (1, 4)

    tb = _pick_batch_tile(B, block_b)
    n_tiles = pl.cdiv(B, tb)

    def resident(p):
        # Constant block index -> parameter stays resident in VMEM across the
        # whole grid instead of being re-fetched per tile.
        return pl.BlockSpec(p.shape, lambda i: (0, 0))

    flops = 2 * B * (D_IN * D_H1 + D_H1 * D_H2 + D_H2 * D_OUT)
    bytes_accessed = (
        B * D_IN * 4                                   # streamed f32 x
        + B * D_OUT * 4                                # f32 out
        + sum(int(p.size) * 4 for p in (w1, b1, w2, b2, w3, b3))
    )

    return pl.pallas_call(
        mlp_kernel,
        out_shape=jax.ShapeDtypeStruct((B, D_OUT), jnp.float32),
        grid=(n_tiles,),
        in_specs=[
            pl.BlockSpec((tb, D_IN), lambda i: (i, 0)),    # streamed x tiles
            resident(w1), resident(b1),
            resident(w2), resident(b2),
            resident(w3), resident(b3),
        ],
        out_specs=pl.BlockSpec((tb, D_OUT), lambda i: (i, 0)),
        compiler_params=pltpu.CompilerParams(
            dimension_semantics=("parallel",),             # 2 TCs on v7x
            vmem_limit_bytes=_VMEM_LIMIT_BYTES,
        ),
        cost_estimate=pl.CostEstimate(
            flops=flops, transcendentals=0, bytes_accessed=bytes_accessed),
    )(x, w1, b1, w2, b2, w3, b3)


def init_params(key):
    """Deterministic synthetic parameters matching nn.Linear init/shapes.

    PyTorch shapes: hidden1.weight (30, 80), hidden2.weight (10, 30),
    output.weight (4, 10); biases (30,), (10,), (4,).  Weights are stored
    transposed to (in, out) for the kernel's x @ W layout; biases as (1, out).
    """
    ks = jax.random.split(key, 6)

    def linear(kw, kb, fan_in, fan_out):
        bound = 1.0 / jnp.sqrt(fan_in)
        w = jax.random.uniform(kw, (fan_out, fan_in), jnp.float32, -bound, bound)
        b = jax.random.uniform(kb, (fan_out,), jnp.float32, -bound, bound)
        return w.T, b.reshape(1, fan_out)

    w1, b1 = linear(ks[0], ks[1], D_IN, D_H1)
    w2, b2 = linear(ks[2], ks[3], D_H1, D_H2)
    w3, b3 = linear(ks[4], ks[5], D_H2, D_OUT)
    return {"w1": w1, "b1": b1, "w2": w2, "b2": b2, "w3": w3, "b3": b3}


def reference_forward(x, params):
    """Pure-f32 JAX reference matching the PyTorch module."""
    h1 = jnp.maximum(jnp.dot(x, params["w1"]) + params["b1"], 0.0)
    h2 = jnp.maximum(jnp.dot(h1, params["w2"]) + params["b2"], 0.0)
    return jnp.dot(h2, params["w3"]) + params["b3"]


if __name__ == "__main__":
    key = jax.random.PRNGKey(0)
    k_params, k_x = jax.random.split(key)

    params = init_params(k_params)

    B = 20
    x = jax.random.normal(k_x, (B, D_IN), jnp.float32)
    ref = reference_forward(x, params)

    # Small tile: exercises a multi-step grid plus a ragged last block
    # (20 rows -> blocks of 8, 8, 4) with no wrapper-side padding.
    out_small = jax.block_until_ready(multiclass_forward(x, params, block_b=8))
    assert out_small.shape == (B, D_OUT), out_small.shape
    assert jnp.allclose(out_small, ref, atol=5e-3, rtol=5e-3), "mismatch (block_b=8)"

    # Production configuration (large default tile; single partial block here).
    out_default = jax.block_until_ready(multiclass_forward(x, params))
    assert out_default.shape == (B, D_OUT), out_default.shape
    assert jnp.allclose(out_default, ref, atol=5e-3, rtol=5e-3), "mismatch (default)"

    print("KERNEL_OK")
</pallas_src>

<mosaic_0001>
module attributes {stable_mosaic.version = 11 : i64} {
  func.func @mlp_kernel(%arg0: i32, %arg1: memref<8x80xf32, #tpu.memory_space<vmem>>, %arg2: memref<80x30xf32, #tpu.memory_space<vmem>>, %arg3: memref<1x30xf32, #tpu.memory_space<vmem>>, %arg4: memref<30x10xf32, #tpu.memory_space<vmem>>, %arg5: memref<1x10xf32, #tpu.memory_space<vmem>>, %arg6: memref<10x4xf32, #tpu.memory_space<vmem>>, %arg7: memref<1x4xf32, #tpu.memory_space<vmem>>, %arg8: memref<8x4xf32, #tpu.memory_space<vmem>>) attributes {dimension_semantics = [#tpu.dimension_semantics<parallel>], iteration_bounds = array<i64: 3>, scalar_prefetch = 0 : i64, scratch_operands = 0 : i64, tpu.core_type = #tpu.core_type<tc>, window_params = [{transform_indices = @transform_0, window_bounds = array<i64: 8, 80>}, {pipeline_mode = #tpu.pipeline_mode<synchronous>, transform_indices = @transform_1, window_bounds = array<i64: 80, 30>}, {pipeline_mode = #tpu.pipeline_mode<synchronous>, transform_indices = @transform_2, window_bounds = array<i64: 1, 30>}, {pipeline_mode = #tpu.pipeline_mode<synchronous>, transform_indices = @transform_3, window_bounds = array<i64: 30, 10>}, {pipeline_mode = #tpu.pipeline_mode<synchronous>, transform_indices = @transform_4, window_bounds = array<i64: 1, 10>}, {pipeline_mode = #tpu.pipeline_mode<synchronous>, transform_indices = @transform_5, window_bounds = array<i64: 10, 4>}, {pipeline_mode = #tpu.pipeline_mode<synchronous>, transform_indices = @transform_6, window_bounds = array<i64: 1, 4>}, {transform_indices = @transform_7, window_bounds = array<i64: 8, 4>}]} {
    %c0 = arith.constant 0 : index
    %c0_0 = arith.constant 0 : index
    %0 = vector.load %arg1[%c0, %c0_0] : memref<8x80xf32, #tpu.memory_space<vmem>>, vector<8x80xf32>
    %c0_1 = arith.constant 0 : index
    %c0_2 = arith.constant 0 : index
    %1 = vector.load %arg2[%c0_1, %c0_2] : memref<80x30xf32, #tpu.memory_space<vmem>>, vector<80x30xf32>
    %cst = arith.constant dense<0.000000e+00> : vector<8x30xf32>
    %2 = tpu.matmul %0, %1, %cst {dimension_numbers = #tpu.dot_dimension_numbers<[1], [0], [0], [1], [0, 0, 1, 1], [], []>} : vector<8x80xf32>, vector<80x30xf32>, vector<8x30xf32> -> vector<8x30xf32>
    %c0_3 = arith.constant 0 : index
    %c0_4 = arith.constant 0 : index
    %3 = vector.load %arg3[%c0_3, %c0_4] : memref<1x30xf32, #tpu.memory_space<vmem>>, vector<1x30xf32>
    %4 = vector.broadcast %3 : vector<1x30xf32> to vector<8x30xf32>
    %5 = arith.addf %2, %4 : vector<8x30xf32>
    %cst_5 = arith.constant 0.000000e+00 : f32
    %6 = vector.broadcast %cst_5 : f32 to vector<8x30xf32>
    %7 = arith.maximumf %5, %6 : vector<8x30xf32>
    %c0_6 = arith.constant 0 : index
    %c0_7 = arith.constant 0 : index
    %8 = vector.load %arg4[%c0_6, %c0_7] : memref<30x10xf32, #tpu.memory_space<vmem>>, vector<30x10xf32>
    %cst_8 = arith.constant dense<0.000000e+00> : vector<8x10xf32>
    %9 = tpu.matmul %7, %8, %cst_8 {dimension_numbers = #tpu.dot_dimension_numbers<[1], [0], [0], [1], [0, 0, 1, 1], [], []>} : vector<8x30xf32>, vector<30x10xf32>, vector<8x10xf32> -> vector<8x10xf32>
    %c0_9 = arith.constant 0 : index
    %c0_10 = arith.constant 0 : index
    %10 = vector.load %arg5[%c0_9, %c0_10] : memref<1x10xf32, #tpu.memory_space<vmem>>, vector<1x10xf32>
    %11 = vector.broadcast %10 : vector<1x10xf32> to vector<8x10xf32>
    %12 = arith.addf %9, %11 : vector<8x10xf32>
    %cst_11 = arith.constant 0.000000e+00 : f32
    %13 = vector.broadcast %cst_11 : f32 to vector<8x10xf32>
    %14 = arith.maximumf %12, %13 : vector<8x10xf32>
    %c0_12 = arith.constant 0 : index
    %c0_13 = arith.constant 0 : index
    %15 = vector.load %arg6[%c0_12, %c0_13] : memref<10x4xf32, #tpu.memory_space<vmem>>, vector<10x4xf32>
    %cst_14 = arith.constant dense<0.000000e+00> : vector<8x4xf32>
    %16 = tpu.matmul %14, %15, %cst_14 {dimension_numbers = #tpu.dot_dimension_numbers<[1], [0], [0], [1], [0, 0, 1, 1], [], []>} : vector<8x10xf32>, vector<10x4xf32>, vector<8x4xf32> -> vector<8x4xf32>
    %c0_15 = arith.constant 0 : index
    %c0_16 = arith.constant 0 : index
    %17 = vector.load %arg7[%c0_15, %c0_16] : memref<1x4xf32, #tpu.memory_space<vmem>>, vector<1x4xf32>
    %18 = vector.broadcast %17 : vector<1x4xf32> to vector<8x4xf32>
    %19 = arith.addf %16, %18 : vector<8x4xf32>
    %c0_17 = arith.constant 0 : index
    %c0_18 = arith.constant 0 : index
    %20 = vector.load %arg8[%c0_17, %c0_18] : memref<8x4xf32, #tpu.memory_space<vmem>>, vector<8x4xf32>
    tpu.vector_store %arg8[%c0_17, %c0_18], %19 {strides = array<i32>} : memref<8x4xf32, #tpu.memory_space<vmem>>, vector<8x4xf32>,
    return
  }
  func.func @transform_0(%arg0: i32) -> (i32, i32) {
    %c0_i32 = arith.constant 0 : i32
    %c0_i32_0 = arith.constant 0 : i32
    return %arg0, %c0_i32 : i32, i32
  }
  func.func @transform_1(%arg0: i32) -> (i32, i32) {
    %c0_i32 = arith.constant 0 : i32
    %c0_i32_0 = arith.constant 0 : i32
    %c0_i32_1 = arith.constant 0 : i32
    return %c0_i32, %c0_i32_0 : i32, i32
  }
  func.func @transform_2(%arg0: i32) -> (i32, i32) {
    %c0_i32 = arith.constant 0 : i32
    %c0_i32_0 = arith.constant 0 : i32
    %c0_i32_1 = arith.constant 0 : i32
    return %c0_i32, %c0_i32_0 : i32, i32
  }
  func.func @transform_3(%arg0: i32) -> (i32, i32) {
    %c0_i32 = arith.constant 0 : i32
    %c0_i32_0 = arith.constant 0 : i32
    %c0_i32_1 = arith.constant 0 : i32
    return %c0_i32, %c0_i32_0 : i32, i32
  }
  func.func @transform_4(%arg0: i32) -> (i32, i32) {
    %c0_i32 = arith.constant 0 : i32
    %c0_i32_0 = arith.constant 0 : i32
    %c0_i32_1 = arith.constant 0 : i32
    return %c0_i32, %c0_i32_0 : i32, i32
  }
  func.func @transform_5(%arg0: i32) -> (i32, i32) {
    %c0_i32 = arith.constant 0 : i32
    %c0_i32_0 = arith.constant 0 : i32
    %c0_i32_1 = arith.constant 0 : i32
    return %c0_i32, %c0_i32_0 : i32, i32
  }
  func.func @transform_6(%arg0: i32) -> (i32, i32) {
    %c0_i32 = arith.constant 0 : i32
    %c0_i32_0 = arith.constant 0 : i32
    %c0_i32_1 = arith.constant 0 : i32
    return %c0_i32, %c0_i32_0 : i32, i32
  }
  func.func @transform_7(%arg0: i32) -> (i32, i32) {
    %c0_i32 = arith.constant 0 : i32
    %c0_i32_0 = arith.constant 0 : i32
    return %arg0, %c0_i32 : i32, i32
  }
}

</mosaic_0001>

<llo_original>
// kernel: tpu_custom_call.1
$region0: #{tpu_custom_call.1}
  #allocation0 [shape = 'u32[]', space=smem, size = 0x4, offset = 0x4, fixed_abs, tag = 'smem constant byte address 0x4 - core index']
  #allocation1 [shape = 'u32[144,128]{1,0:T(1,128)}', space=vmem, size = 0x12000, scoped, tag = 'internal scratch']
  %s0 = inlined_call_operand.vmem [shape: f32[20,80], index: 0, kind: input, shape index: {}]
  %s1 = inlined_call_operand.vmem [shape: f32[80,30], index: 1, kind: input, shape index: {}]
  %s2 = inlined_call_operand.vmem [shape: f32[1,30], index: 2, kind: input, shape index: {}]
  %s3 = inlined_call_operand.vmem [shape: f32[30,10], index: 3, kind: input, shape index: {}]
  %s4 = inlined_call_operand.vmem [shape: f32[1,10], index: 4, kind: input, shape index: {}]
  %s5 = inlined_call_operand.vmem [shape: f32[10,4], index: 5, kind: input, shape index: {}]
  %s6 = inlined_call_operand.vmem [shape: f32[1,4], index: 6, kind: input, shape index: {}]
  %s7 = inlined_call_operand.vmem [shape: f32[20,4], index: 7, kind: output, shape index: {}]
  %s8 = sld [smem:[#allocation0]]
  $region61: #{tpu_custom_call.1} parent=0
    _
  %s10 = ssub.s32 1, %s8
  %s11 = scalar_select 0, %s10, %s8
  loop: start=0, step=1, limit=5
  $region2: #{tpu_custom_call.1} parent=0 // loop_pre_header
    _
  $region3: #{tpu_custom_call.1} parent=0 // loop_header
    %s13 = sphi 0, %s17
    %p14 = scmp.ge.s32.totalorder %s13, 5
    %s23 = sphi 0, %s25
    %s26 = sphi 0, %s23
    %s27 = sphi 0, %s26
    %s43 = sphi 0, %s27
    %s47 = sphi 0, %s47
    %s49 = sphi 0, %s47
    %s50 = sphi 0, %s49
    %s64 = sphi 0, %s50
    %s68 = sphi 0, %s68
    %s70 = sphi 0, %s68
    %s71 = sphi 0, %s70
    %s85 = sphi 0, %s71
    %s89 = sphi 0, %s89
    %s91 = sphi 0, %s89
    %s92 = sphi 0, %s91
    %s106 = sphi 0, %s92
    %s110 = sphi 0, %s110
    %s112 = sphi 0, %s110
    %s113 = sphi 0, %s112
    %s127 = sphi 0, %s113
    %s131 = sphi 0, %s131
    %s133 = sphi 0, %s131
    %s134 = sphi 0, %s133
    %s148 = sphi 0, %s134
    %s152 = sphi 0, %s152
    %s154 = sphi 0, %s152
    %s155 = sphi 0, %s154
    %s169 = sphi 0, %s155
    %s175 = sphi 0, %s177
    %s178 = sphi 0, %s175
    %s179 = sphi 0, %s178
    %s195 = sphi 0, %s179
  $region4: #{tpu_custom_call.1} parent=0 // loop_header_branch
    %16 = sbr.rel (%p14) target = $region8
  $region5: #{tpu_custom_call.1} parent=0 // loop_body
    %s18 = ssub.s32 %s13, 1
    %s19 = ssub.s32 %s13, 2
    %s20 = sadd.s32 %s13, 1
    %s21 = ssub.s32 %s13, %s20
    %p22 = scmp.eq.s32.totalorder %s21, 0
    %s24 = sadd.s32 %s23, 1
    %s25 = scalar_select %p22, %s23, %s24
    %p28 = pneg %p22
    %p29 = scmp.eq.s32.totalorder %s13, 2
    %p30 = por %p28, %p29
    %p31 = scmp.ne.s32.totalorder %s23, %s26
    %p32 = scmp.eq.s32.totalorder %s13, 0
    %p33 = por %p31, %p32
    %p34 = scmp.ne.s32.totalorder %s23, %s26
    %p35 = scmp.eq.s32.totalorder %s18, 2
    %p36 = por %p34, %p35
    %p37 = scmp.ne.s32.totalorder %s26, %s27
    %p38 = scmp.eq.s32.totalorder %s18, 0
    %p39 = por %p37, %p38
    %p40 = scmp.ne.s32.totalorder %s26, %s27
    %p41 = scmp.eq.s32.totalorder %s19, 2
    %p42 = por %p40, %p41
    %p44 = scmp.ne.s32.totalorder %s27, %s43
    %p45 = scmp.eq.s32.totalorder %s19, 0
    %p46 = por %p44, %p45
    %s48 = sadd.s32 %s47, 1
    %p51 = scmp.eq.s32.totalorder %s13, 2
    %p52 = scmp.ne.s32.totalorder %s47, %s49
    %p53 = scmp.eq.s32.totalorder %s13, 0
    %p54 = por %p52, %p53
    %p55 = scmp.ne.s32.totalorder %s47, %s49
    %p56 = scmp.eq.s32.totalorder %s18, 2
    %p57 = por %p55, %p56
    %p58 = scmp.ne.s32.totalorder %s49, %s50
    %p59 = scmp.eq.s32.totalorder %s18, 0
    %p60 = por %p58, %p59
    %p61 = scmp.ne.s32.totalorder %s49, %s50
    %p62 = scmp.eq.s32.totalorder %s19, 2
    %p63 = por %p61, %p62
    %p65 = scmp.ne.s32.totalorder %s50, %s64
    %p66 = scmp.eq.s32.totalorder %s19, 0
    %p67 = por %p65, %p66
    %s69 = sadd.s32 %s68, 1
    %p72 = scmp.eq.s32.totalorder %s13, 2
    %p73 = scmp.ne.s32.totalorder %s68, %s70
    %p74 = scmp.eq.s32.totalorder %s13, 0
    %p75 = por %p73, %p74
    %p76 = scmp.ne.s32.totalorder %s68, %s70
    %p77 = scmp.eq.s32.totalorder %s18, 2
    %p78 = por %p76, %p77
    %p79 = scmp.ne.s32.totalorder %s70, %s71
    %p80 = scmp.eq.s32.totalorder %s18, 0
    %p81 = por %p79, %p80
    %p82 = scmp.ne.s32.totalorder %s70, %s71
    %p83 = scmp.eq.s32.totalorder %s19, 2
    %p84 = por %p82, %p83
    %p86 = scmp.ne.s32.totalorder %s71, %s85
    %p87 = scmp.eq.s32.totalorder %s19, 0
    %p88 = por %p86, %p87
    %s90 = sadd.s32 %s89, 1
    %p93 = scmp.eq.s32.totalorder %s13, 2
    %p94 = scmp.ne.s32.totalorder %s89, %s91
    %p95 = scmp.eq.s32.totalorder %s13, 0
    %p96 = por %p94, %p95
    %p97 = scmp.ne.s32.totalorder %s89, %s91
    %p98 = scmp.eq.s32.totalorder %s18, 2
    %p99 = por %p97, %p98
    %p100 = scmp.ne.s32.totalorder %s91, %s92
    %p101 = scmp.eq.s32.totalorder %s18, 0
    %p102 = por %p100, %p101
    %p103 = scmp.ne.s32.totalorder %s91, %s92
    %p104 = scmp.eq.s32.totalorder %s19, 2
    %p105 = por %p103, %p104
    %p107 = scmp.ne.s32.totalorder %s92, %s106
    %p108 = scmp.eq.s32.totalorder %s19, 0
    %p109 = por %p107, %p108
    %s111 = sadd.s32 %s110, 1
    %p114 = scmp.eq.s32.totalorder %s13, 2
    %p115 = scmp.ne.s32.totalorder %s110, %s112
    %p116 = scmp.eq.s32.totalorder %s13, 0
    %p117 = por %p115, %p116
    %p118 = scmp.ne.s32.totalorder %s110, %s112
    %p119 = scmp.eq.s32.totalorder %s18, 2
    %p120 = por %p118, %p119
    %p121 = scmp.ne.s32.totalorder %s112, %s113
    %p122 = scmp.eq.s32.totalorder %s18, 0
    %p123 = por %p121, %p122
    %p124 = scmp.ne.s32.totalorder %s112, %s113
    %p125 = scmp.eq.s32.totalorder %s19, 2
    %p126 = por %p124, %p125
    %p128 = scmp.ne.s32.totalorder %s113, %s127
    %p129 = scmp.eq.s32.totalorder %s19, 0
    %p130 = por %p128, %p129
    %s132 = sadd.s32 %s131, 1
    %p135 = scmp.eq.s32.totalorder %s13, 2
    %p136 = scmp.ne.s32.totalorder %s131, %s133
    %p137 = scmp.eq.s32.totalorder %s13, 0
    %p138 = por %p136, %p137
    %p139 = scmp.ne.s32.totalorder %s131, %s133
    %p140 = scmp.eq.s32.totalorder %s18, 2
    %p141 = por %p139, %p140
    %p142 = scmp.ne.s32.totalorder %s133, %s134
    %p143 = scmp.eq.s32.totalorder %s18, 0
    %p144 = por %p142, %p143
    %p145 = scmp.ne.s32.totalorder %s133, %s134
    %p146 = scmp.eq.s32.totalorder %s19, 2
    %p147 = por %p145, %p146
    %p149 = scmp.ne.s32.totalorder %s134, %s148
    %p150 = scmp.eq.s32.totalorder %s19, 0
    %p151 = por %p149, %p150
    %s153 = sadd.s32 %s152, 1
    %p156 = scmp.eq.s32.totalorder %s13, 2
    %p157 = scmp.ne.s32.totalorder %s152, %s154
    %p158 = scmp.eq.s32.totalorder %s13, 0
    %p159 = por %p157, %p158
    %p160 = scmp.ne.s32.totalorder %s152, %s154
    %p161 = scmp.eq.s32.totalorder %s18, 2
    %p162 = por %p160, %p161
    %p163 = scmp.ne.s32.totalorder %s154, %s155
    %p164 = scmp.eq.s32.totalorder %s18, 0
    %p165 = por %p163, %p164
    %p166 = scmp.ne.s32.totalorder %s154, %s155
    %p167 = scmp.eq.s32.totalorder %s19, 2
    %p168 = por %p166, %p167
    %p170 = scmp.ne.s32.totalorder %s155, %s169
    %p171 = scmp.eq.s32.totalorder %s19, 0
    %p172 = por %p170, %p171
    %s173 = ssub.s32 %s13, %s20
    %p174 = scmp.eq.s32.totalorder %s173, 0
    %s176 = sadd.s32 %s175, 1
    %s177 = scalar_select %p174, %s175, %s176
    %p180 = pneg %p174
    %p181 = scmp.eq.s32.totalorder %s13, 2
    %p182 = por %p180, %p181
    %p183 = scmp.ne.s32.totalorder %s175, %s178
    %p184 = scmp.eq.s32.totalorder %s13, 0
    %p185 = por %p183, %p184
    %p186 = scmp.ne.s32.totalorder %s175, %s178
    %p187 = scmp.eq.s32.totalorder %s18, 2
    %p188 = por %p186, %p187
    %p189 = scmp.ne.s32.totalorder %s178, %s179
    %p190 = scmp.eq.s32.totalorder %s18, 0
    %p191 = por %p189, %p190
    %p192 = scmp.ne.s32.totalorder %s178, %s179
    %p193 = scmp.eq.s32.totalorder %s19, 2
    %p194 = por %p192, %p193
    %p196 = scmp.ne.s32.totalorder %s179, %s195
    %p197 = scmp.eq.s32.totalorder %s19, 0
    %p198 = por %p196, %p197
    %p199 = scmp.le.s32.totalorder 1, %s13
    %p200 = scmp.lt.s32.totalorder %s13, 4
    %p201 = pnand %p199, %p200
    %p202 = pneg %p201
    // Predicated region
    $region9: #{tpu_custom_call.1} parent=5 // pred_check
      _
    $region10: #{tpu_custom_call.1} parent=5 // pred_check_branch
      %204 = sbr.rel (%p201) target = $region12
    $region11: #{tpu_custom_call.1} parent=5 // pred_region
      %s205 = ssub.s32 %s13, 1
      // Predicated region
      $region13: #{tpu_custom_call.1} parent=11 // pred_check
        %p206 = pneg %p60
      $region14: #{tpu_custom_call.1} parent=11 // pred_check_branch
        %208 = sbr.rel (%p206) target = $region16
      $region15: #{tpu_custom_call.1} parent=11 // pred_region
        _
      $region16: #{tpu_custom_call.1} parent=11 // pred_fallthru
        _
      // Predicated region
      $region17: #{tpu_custom_call.1} parent=11 // pred_check
        %p209 = pneg %p81
      $region18: #{tpu_custom_call.1} parent=11 // pred_check_branch
        %211 = sbr.rel (%p209) target = $region20
      $region19: #{tpu_custom_call.1} parent=11 // pred_region
        _
      $region20: #{tpu_custom_call.1} parent=11 // pred_fallthru
        _
      // Predicated region
      $region21: #{tpu_custom_call.1} parent=11 // pred_check
        %p212 = pneg %p102
      $region22: #{tpu_custom_call.1} parent=11 // pred_check_branch
        %214 = sbr.rel (%p212) target = $region24
      $region23: #{tpu_custom_call.1} parent=11 // pred_region
        _
      $region24: #{tpu_custom_call.1} parent=11 // pred_fallthru
        _
      // Predicated region
      $region25: #{tpu_custom_call.1} parent=11 // pred_check
        %p215 = pneg %p123
      $region26: #{tpu_custom_call.1} parent=11 // pred_check_branch
        %217 = sbr.rel (%p215) target = $region28
      $region27: #{tpu_custom_call.1} parent=11 // pred_region
        _
      $region28: #{tpu_custom_call.1} parent=11 // pred_fallthru
        _
      // Predicated region
      $region29: #{tpu_custom_call.1} parent=11 // pred_check
        %p218 = pneg %p144
      $region30: #{tpu_custom_call.1} parent=11 // pred_check_branch
        %220 = sbr.rel (%p218) target = $region32
      $region31: #{tpu_custom_call.1} parent=11 // pred_region
        _
      $region32: #{tpu_custom_call.1} parent=11 // pred_fallthru
        _
      // Predicated region
      $region33: #{tpu_custom_call.1} parent=11 // pred_check
        %p221 = pneg %p165
      $region34: #{tpu_custom_call.1} parent=11 // pred_check_branch
        %223 = sbr.rel (%p221) target = $region36
      $region35: #{tpu_custom_call.1} parent=11 // pred_region
        _
      $region36: #{tpu_custom_call.1} parent=11 // pred_fallthru
        _
    $region12: #{tpu_custom_call.1} parent=5 // pred_fallthru
      _
    %p224 = scmp.lt.s32.totalorder %s13, 3
    // Predicated region
    $region37: #{tpu_custom_call.1} parent=5 // pred_check
      %p225 = pneg %p224
    $region38: #{tpu_custom_call.1} parent=5 // pred_check_branch
      %227 = sbr.rel (%p225) target = $region40
    $region39: #{tpu_custom_call.1} parent=5 // pred_region
      // Predicated region
      $region41: #{tpu_custom_call.1} parent=39 // pred_check
        %p228 = pneg %p33
      $region42: #{tpu_custom_call.1} parent=39 // pred_check_branch
        %230 = sbr.rel (%p228) target = $region44
      $region43: #{tpu_custom_call.1} parent=39 // pred_region
        %p231 = scmp.lt.s32.totalorder %s13, 2
        %s232 = scalar_select %p231, %s13, 2
        %s233 = smul.addr %s232, 8
        %s234 = scalar_lea.vmem %s0, %s233
      $region44: #{tpu_custom_call.1} parent=39 // pred_fallthru
        _
    $region40: #{tpu_custom_call.1} parent=5 // pred_fallthru
      _
    %p235 = scmp.le.s32.totalorder 1, %s13
    %p236 = scmp.lt.s32.totalorder %s13, 4
    %p237 = pnand %p235, %p236
    %p238 = pneg %p237
    // Predicated region
    $region45: #{tpu_custom_call.1} parent=5 // pred_check
      _
    $region46: #{tpu_custom_call.1} parent=5 // pred_check_branch
      %240 = sbr.rel (%p237) target = $region48
    $region47: #{tpu_custom_call.1} parent=5 // pred_region
      %s241 = ssub.s32 %s13, 1
      %p242 = scmp.lt.s32.totalorder %s18, 2
      %s243 = scalar_select %p242, %s18, 2
      %s244 = smul.addr %s243, 8
      %s245 = scalar_lea.vmem %s0, %s244
      %p246 = pneg %p39
      %p247 = pneg %p36
      %p248 = pneg %p60
      %p249 = pneg %p57
      %p250 = pneg %p81
      %p251 = pneg %p78
      %p252 = pneg %p102
      %p253 = pneg %p99
      %p254 = pneg %p123
      %p255 = pneg %p120
      %p256 = pneg %p144
      %p257 = pneg %p141
      %p258 = pneg %p165
      %p259 = pneg %p162
      %p260 = pneg %p191
      %p261 = pneg %p188
      %p262 = scmp.lt.s32.totalorder %s18, 2
      %s263 = scalar_select %p262, %s18, 2
      %s264 = smul.addr %s263, 8
      %s265 = scalar_lea.vmem %s7, %s264
      %p266 = scmp.lt.s32.totalorder %s18, 2
      %s267 = scalar_select %p266, %s18, 2
      %s268 = smul.addr %s267, 8
      %s269 = scalar_lea.vmem %s0, %s268
      %p270 = scmp.lt.s32.totalorder %s18, 2
      %s271 = scalar_select %p270, %s18, 2
      %s272 = smul.addr %s271, 8
      %s273 = scalar_lea.vmem %s7, %s272
      %v274 = vld [vmem:[%s269] sm:$0xff]
      %v275 = vld [vmem:[%s1] sm:$0xff]
      %v276 = vld [vmem:[%s1 + $0x8] sm:$0xff]
      %v277 = vld [vmem:[%s1 + $0x10] sm:$0xff]
      %v278 = vld [vmem:[%s1 + $0x18] sm:$0xff]
      %v279 = vld [vmem:[%s1 + $0x20] sm:$0xff]
      %v280 = vld [vmem:[%s1 + $0x28] sm:$0xff]
      %v281 = vld [vmem:[%s1 + $0x30] sm:$0xff]
      %v282 = vld [vmem:[%s1 + $0x38] sm:$0xff]
      %v283 = vld [vmem:[%s1 + $0x40] sm:$0xff]
      %v284 = vld [vmem:[%s1 + $0x48] sm:$0xff]
      %v285 = vld [vmem:[%s2] sm:$0x1]
      %v287 = vlaneseq
      %v288 = vshrl.u32 %v287, 7
      %v289 = vsub.s32 0, %v288
      %v290 = vrot.slane %v285, %v289
      %vm292 = vcmask 654336
      %v294 = vsel %vm292, %v274, 0
      %296 = vmatprep.subr.mxu0 0.0
      %297 = vmatpush1.msra.mxu0 %v275
      %298 = vmatprep.subr.mxu0 0.0
      %299 = vmatpush1.msra.mxu0 %v276
      %300 = vmatprep.subr.mxu0 0.0
      %301 = vmatpush1.msra.mxu0 %v277
      %302 = vmatprep.subr.mxu0 0.0
      %303 = vmatpush1.msra.mxu0 %v278
      %304 = vmatprep.subr.mxu0 0.0
      %305 = vmatpush1.msra.mxu0 %v279
      %306 = vmatprep.subr.mxu0 0.0
      %307 = vmatpush1.msra.mxu0 %v280
      %308 = vmatprep.subr.mxu0 0.0
      %309 = vmatpush1.msra.mxu0 %v281
      %310 = vmatprep.subr.mxu0 0.0
      %311 = vmatpush1.msra.mxu0 %v282
      %312 = vmatprep.subr.mxu0 0.0
      %313 = vmatpush1.msra.mxu0 %v283
      %314 = vmatprep.subr.mxu0 0.0
      %315 = vmatpush1.msra.mxu0 %v284
      %316 = vmatprep.subr.mxu0 0.0
      %317 = vmatpush1.msra.mxu0 0.0
      %318 = vmatprep.subr.mxu0 0.0
      %319 = vmatpush1.msra.mxu0 0.0
      %320 = vmatprep.subr.mxu0 0.0
      %321 = vmatpush1.msra.mxu0 0.0
      %322 = vmatprep.subr.mxu0 0.0
      %323 = vmatpush1.msra.mxu0 0.0
      %324 = vmatprep.subr.mxu0 0.0
      %325 = vmatpush1.msra.mxu0 0.0
      %326 = vmatprep.subr.mxu0 0.0
      %327 = vmatpush1.msra.mxu0 0.0
      %328 = vmatprep.subr.mxu0 0.0
      %329 = vmatpush1.msra.mxu0 0.0
      %330 = vmatprep.subr.mxu0 0.0
      %331 = vmatpush1.msra.mxu0 0.0
      %332 = vmatprep.subr.mxu0 0.0
      %333 = vmatpush1.msra.mxu0 0.0
      %334 = vmatprep.subr.mxu0 0.0
      %335 = vmatpush1.msra.mxu0 0.0
      %336 = vmatprep.subr.mxu0 0.0
      %337 = vmatpush1.msra.mxu0 0.0
      %338 = vmatprep.subr.mxu0 0.0
      %339 = vmatpush1.msra.mxu0 0.0
      %340 = vmatprep.subr.mxu0 0.0
      %341 = vmatpush1.msra.mxu0 0.0
      %342 = vmatprep.subr.mxu0 0.0
      %343 = vmatpush1.msra.mxu0 0.0
      %344 = vmatprep.subr.mxu0 0.0
      %345 = vmatpush1.msra.mxu0 0.0
      %346 = vmatprep.subr.mxu0 0.0
      %347 = vmatpush1.msra.mxu0 0.0
      %348 = vmatprep.subr.mxu0 0.0
      %349 = vmatpush1.msra.mxu0 0.0
      %350 = vmatprep.subr.mxu0 0.0
      %351 = vmatpush1.msra.mxu0 0.0
      %352 = vmatprep.subr.mxu0 0.0
      %353 = vmatpush1.msra.mxu0 0.0
      %354 = vmatprep.subr.mxu0 0.0
      %355 = vmatpush1.msra.mxu0 0.0
      %356 = vmatprep.subr.mxu0 0.0
      %357 = vmatpush1.msra.mxu0 0.0
      %358 = vmatprep.subr.mxu0 0.0
      %359 = vmatpush1.msra.mxu0 0.0
      %360 = vmatprep.mubr.f32.mxu0 0.0
      %361 = vmatmul.mubr.f32.gmra.mrb[0].mxu0 %v294
      %v362 = vpop.f32.mrb[0].mxu0
      %v363 = vadd.f32 %v290, %v362
      %v364 = vpop.f32.mrb[0].mxu0
      %365 = vdwg.mxu0
      %v366 = vmax.f32 %v363, 0.0
      %v367 = vld [vmem:[%s3] sm:$0xff]
      %v368 = vld [vmem:[%s3 + $0x8] sm:$0xff]
      %v369 = vld [vmem:[%s3 + $0x10] sm:$0xff]
      %v370 = vld [vmem:[%s3 + $0x18] sm:$0x3f]
      %v371 = vld [vmem:[%s4] sm:$0x1]
      %v373 = vlaneseq
      %v374 = vshrl.u32 %v373, 7
      %v375 = vsub.s32 0, %v374
      %v376 = vrot.slane %v371, %v375
      %vm378 = vcmask 244736
      %v380 = vsel %vm378, %v366, 0
      %vm382 = vcmask 1045504
      %v384 = vsel %vm382, %v370, 0
      %386 = vmatprep.subr.mxu0 0.0
      %387 = vmatpush1.msra.mxu0 %v367
      %388 = vmatprep.subr.mxu0 0.0
      %389 = vmatpush1.msra.mxu0 %v368
      %390 = vmatprep.subr.mxu0 0.0
      %391 = vmatpush1.msra.mxu0 %v369
      %392 = vmatprep.subr.mxu0 0.0
      %393 = vmatpush1.msra.mxu0 %v384
      %394 = vmatprep.subr.mxu0 0.0
      %395 = vmatpush1.msra.mxu0 0.0
      %396 = vmatprep.subr.mxu0 0.0
      %397 = vmatpush1.msra.mxu0 0.0
      %398 = vmatprep.subr.mxu0 0.0
      %399 = vmatpush1.msra.mxu0 0.0
      %400 = vmatprep.subr.mxu0 0.0
      %401 = vmatpush1.msra.mxu0 0.0
      %402 = vmatprep.subr.mxu0 0.0
      %403 = vmatpush1.msra.mxu0 0.0
      %404 = vmatprep.subr.mxu0 0.0
      %405 = vmatpush1.msra.mxu0 0.0
      %406 = vmatprep.subr.mxu0 0.0
      %407 = vmatpush1.msra.mxu0 0.0
      %408 = vmatprep.subr.mxu0 0.0
      %409 = vmatpush1.msra.mxu0 0.0
      %410 = vmatprep.subr.mxu0 0.0
      %411 = vmatpush1.msra.mxu0 0.0
      %412 = vmatprep.subr.mxu0 0.0
      %413 = vmatpush1.msra.mxu0 0.0
      %414 = vmatprep.subr.mxu0 0.0
      %415 = vmatpush1.msra.mxu0 0.0
      %416 = vmatprep.subr.mxu0 0.0
      %417 = vmatpush1.msra.mxu0 0.0
      %418 = vmatprep.subr.mxu0 0.0
      %419 = vmatpush1.msra.mxu0 0.0
      %420 = vmatprep.subr.mxu0 0.0
      %421 = vmatpush1.msra.mxu0 0.0
      %422 = vmatprep.subr.mxu0 0.0
      %423 = vmatpush1.msra.mxu0 0.0
      %424 = vmatprep.subr.mxu0 0.0
      %425 = vmatpush1.msra.mxu0 0.0
      %426 = vmatprep.subr.mxu0 0.0
      %427 = vmatpush1.msra.mxu0 0.0
      %428 = vmatprep.subr.mxu0 0.0
      %429 = vmatpush1.msra.mxu0 0.0
      %430 = vmatprep.subr.mxu0 0.0
      %431 = vmatpush1.msra.mxu0 0.0
      %432 = vmatprep.subr.mxu0 0.0
      %433 = vmatpush1.msra.mxu0 0.0
      %434 = vmatprep.subr.mxu0 0.0
      %435 = vmatpush1.msra.mxu0 0.0
      %436 = vmatprep.subr.mxu0 0.0
      %437 = vmatpush1.msra.mxu0 0.0
      %438 = vmatprep.subr.mxu0 0.0
      %439 = vmatpush1.msra.mxu0 0.0
      %440 = vmatprep.subr.mxu0 0.0
      %441 = vmatpush1.msra.mxu0 0.0
      %442 = vmatprep.subr.mxu0 0.0
      %443 = vmatpush1.msra.mxu0 0.0
      %444 = vmatprep.subr.mxu0 0.0
      %445 = vmatpush1.msra.mxu0 0.0
      %446 = vmatprep.subr.mxu0 0.0
      %447 = vmatpush1.msra.mxu0 0.0
      %448 = vmatprep.subr.mxu0 0.0
      %449 = vmatpush1.msra.mxu0 0.0
      %450 = vmatprep.mubr.f32.mxu0 0.0
      %451 = vmatmul.mubr.f32.gmra.mrb[0].mxu0 %v380
      %v452 = vpop.f32.mrb[0].mxu0
      %v453 = vadd.f32 %v376, %v452
      %v454 = vpop.f32.mrb[0].mxu0
      %455 = vdwg.mxu0
      %v456 = vmax.f32 %v453, 0.0
      %v457 = vld [vmem:[%s5] sm:$0xff]
      %v458 = vld [vmem:[%s5 + $0x8] sm:$0x3]
      %v459 = vld [vmem:[%s6] sm:$0x1]
      %v461 = vlaneseq
      %v462 = vshrl.u32 %v461, 7
      %v463 = vsub.s32 0, %v462
      %v464 = vrot.slane %v459, %v463
      %vm466 = vcmask 80896
      %v468 = vsel %vm466, %v456, 0
      %vm470 = vcmask 1041408
      %v472 = vsel %vm470, %v458, 0
      %474 = vmatprep.subr.mxu0 0.0
      %475 = vmatpush1.msra.mxu0 %v457
      %476 = vmatprep.subr.mxu0 0.0
      %477 = vmatpush1.msra.mxu0 %v472
      %478 = vmatprep.subr.mxu0 0.0
      %479 = vmatpush1.msra.mxu0 0.0
      %480 = vmatprep.subr.mxu0 0.0
      %481 = vmatpush1.msra.mxu0 0.0
      %482 = vmatprep.subr.mxu0 0.0
      %483 = vmatpush1.msra.mxu0 0.0
      %484 = vmatprep.subr.mxu0 0.0
      %485 = vmatpush1.msra.mxu0 0.0
      %486 = vmatprep.subr.mxu0 0.0
      %487 = vmatpush1.msra.mxu0 0.0
      %488 = vmatprep.subr.mxu0 0.0
      %489 = vmatpush1.msra.mxu0 0.0
      %490 = vmatprep.subr.mxu0 0.0
      %491 = vmatpush1.msra.mxu0 0.0
      %492 = vmatprep.subr.mxu0 0.0
      %493 = vmatpush1.msra.mxu0 0.0
      %494 = vmatprep.subr.mxu0 0.0
      %495 = vmatpush1.msra.mxu0 0.0
      %496 = vmatprep.subr.mxu0 0.0
      %497 = vmatpush1.msra.mxu0 0.0
      %498 = vmatprep.subr.mxu0 0.0
      %499 = vmatpush1.msra.mxu0 0.0
      %500 = vmatprep.subr.mxu0 0.0
      %501 = vmatpush1.msra.mxu0 0.0
      %502 = vmatprep.subr.mxu0 0.0
      %503 = vmatpush1.msra.mxu0 0.0
      %504 = vmatprep.subr.mxu0 0.0
      %505 = vmatpush1.msra.mxu0 0.0
      %506 = vmatprep.subr.mxu0 0.0
      %507 = vmatpush1.msra.mxu0 0.0
      %508 = vmatprep.subr.mxu0 0.0
      %509 = vmatpush1.msra.mxu0 0.0
      %510 = vmatprep.subr.mxu0 0.0
      %511 = vmatpush1.msra.mxu0 0.0
      %512 = vmatprep.subr.mxu0 0.0
      %513 = vmatpush1.msra.mxu0 0.0
      %514 = vmatprep.subr.mxu0 0.0
      %515 = vmatpush1.msra.mxu0 0.0
      %516 = vmatprep.subr.mxu0 0.0
      %517 = vmatpush1.msra.mxu0 0.0
      %518 = vmatprep.subr.mxu0 0.0
      %519 = vmatpush1.msra.mxu0 0.0
      %520 = vmatprep.subr.mxu0 0.0
      %521 = vmatpush1.msra.mxu0 0.0
      %522 = vmatprep.subr.mxu0 0.0
      %523 = vmatpush1.msra.mxu0 0.0
      %524 = vmatprep.subr.mxu0 0.0
      %525 = vmatpush1.msra.mxu0 0.0
      %526 = vmatprep.subr.mxu0 0.0
      %527 = vmatpush1.msra.mxu0 0.0
      %528 = vmatprep.subr.mxu0 0.0
      %529 = vmatpush1.msra.mxu0 0.0
      %530 = vmatprep.subr.mxu0 0.0
      %531 = vmatpush1.msra.mxu0 0.0
      %532 = vmatprep.subr.mxu0 0.0
      %533 = vmatpush1.msra.mxu0 0.0
      %534 = vmatprep.subr.mxu0 0.0
      %535 = vmatpush1.msra.mxu0 0.0
      %536 = vmatprep.subr.mxu0 0.0
      %537 = vmatpush1.msra.mxu0 0.0
      %538 = vmatprep.mubr.f32.mxu0 0.0
      %539 = vmatmul.mubr.f32.gmra.mrb[0].mxu0 %v468
      %v540 = vpop.f32.mrb[0].mxu0
      %v541 = vadd.f32 %v464, %v540
      %v542 = vpop.f32.mrb[0].mxu0
      %543 = vdwg.mxu0
      %vm544 = vcmask 31744
      %545 = vst.msk [vmem:[%s273] sm:$0xff] %vm544, %v541
      %p546 = scmp.lt.s32.totalorder %s18, 2
      %s547 = scalar_select %p546, %s18, 2
      %s548 = smul.addr %s547, 8
      %s549 = scalar_lea.vmem %s7, %s548
      // Predicated region
      $region49: #{tpu_custom_call.1} parent=47 // pred_check
        %p550 = pneg %p188
      $region50: #{tpu_custom_call.1} parent=47 // pred_check_branch
        %552 = sbr.rel (%p550) target = $region52
      $region51: #{tpu_custom_call.1} parent=47 // pred_region
        _
      $region52: #{tpu_custom_call.1} parent=47 // pred_fallthru
        _
    $region48: #{tpu_custom_call.1} parent=5 // pred_fallthru
      _
    %p553 = scmp.le.s32.totalorder 2, %s13
    // Predicated region
    $region53: #{tpu_custom_call.1} parent=5 // pred_check
      %p554 = pneg %p553
    $region54: #{tpu_custom_call.1} parent=5 // pred_check_branch
      %556 = sbr.rel (%p554) target = $region56
    $region55: #{tpu_custom_call.1} parent=5 // pred_region
      %s557 = ssub.s32 %s13, 2
      // Predicated region
      $region57: #{tpu_custom_call.1} parent=55 // pred_check
        %p558 = pneg %p194
      $region58: #{tpu_custom_call.1} parent=55 // pred_check_branch
        %560 = sbr.rel (%p558) target = $region60
      $region59: #{tpu_custom_call.1} parent=55 // pred_region
        %p561 = scmp.lt.s32.totalorder %s19, 2
        %s562 = scalar_select %p561, %s19, 2
        %s563 = smul.addr %s562, 8
        %s564 = scalar_lea.vmem %s7, %s563
      $region60: #{tpu_custom_call.1} parent=55 // pred_fallthru
        _
    $region56: #{tpu_custom_call.1} parent=5 // pred_fallthru
      _
  $region6: #{tpu_custom_call.1} parent=0 // loop_footer
    %s17 = sadd.s32 1, %s13
  $region7: #{tpu_custom_call.1} parent=0 // loop_footer_branch
    %12 = sbr.rel target = $region3
  $region8: #{tpu_custom_call.1} parent=0 // loop_exit
    _

</llo_original>
